<compile_context>
chip_gen: v7x
topology: tpu7x:2x2x1
jax: 0.10.0
libtpu: 0.0.40
codegen_flags: <defaults>
</compile_context>

<pallas_src>
import jax
import jax.numpy as jnp
from jax.experimental import pallas as pl
from jax.experimental.pallas import tpu as pltpu

# ---- packed parameter slab layout (rows x 128 lanes, f32) -------------------
_ROW_W0 = 0      # 32 rows : fc0 weight, (25,64) zero-padded to (32,128)
_ROW_B0 = 32     #  8 rows : fc0 bias in row 32, cols 0..63
_ROW_W1 = 40     # 128 rows: fc1 weight, (64,64) zero-padded to (128,128)
_ROW_B1 = 168    #  8 rows : fc1 bias in row 168, cols 0..63
_ROW_WH = 176    # 128 rows: fused head weight, actor cols 0..2, critic col 3
_ROW_BH = 304    #  8 rows : fused head bias in row 304, cols 0..3
_TOTAL_ROWS = 312
_K_PAD = 32      # fc0 input dim 25 padded to 32


def _mlp_kernel(x_ref, p_ref, out_ref):
    x = x_ref[...]                                   # (B, 32)

    w0 = p_ref[_ROW_W0:_ROW_W0 + 32, :]              # (32, 128)
    b0 = p_ref[_ROW_B0:_ROW_B0 + 1, :]               # (1, 128)
    w1 = p_ref[_ROW_W1:_ROW_W1 + 128, :]             # (128, 128)
    b1 = p_ref[_ROW_B1:_ROW_B1 + 1, :]               # (1, 128)
    wh = p_ref[_ROW_WH:_ROW_WH + 128, :]             # (128, 128)
    bh = p_ref[_ROW_BH:_ROW_BH + 1, :]               # (1, 128)

    # fc0 + relu  (padded cols stay exactly 0: zero weights + zero bias)
    h0 = jnp.maximum(
        jnp.dot(x, w0, preferred_element_type=jnp.float32) + b0, 0.0)   # (B, 128)
    # fc1 + relu
    h1 = jnp.maximum(
        jnp.dot(h0, w1, preferred_element_type=jnp.float32) + b1, 0.0)  # (B, 128)

    # fused actor|critic head: cols 0..2 actor logits, col 3 critic value
    z = jnp.dot(h1, wh, preferred_element_type=jnp.float32) + bh        # (B, 128)

    # softmax over the batch axis (dim=0), matching the PyTorch module
    m = jnp.max(z, axis=0, keepdims=True)
    e = jnp.exp(z - m)
    s = jnp.sum(e, axis=0, keepdims=True)
    soft = e / s                                                        # exact divide

    # single lane-dense output slab: softmax in actor lanes, raw critic in lane 3
    col = jax.lax.broadcasted_iota(jnp.int32, z.shape, 1)
    out_ref[...] = jnp.where(col == 3, z, soft)


def model_forward(x, packed_params):
    """x: (B, 25) f32.  packed_params: (312, 128) f32 slab from pack_params()."""
    B, K = x.shape
    x_pad = jnp.pad(x, ((0, 0), (0, _K_PAD - K)))
    vmem = pl.BlockSpec(memory_space=pltpu.MemorySpace.VMEM)
    out = pl.pallas_call(
        _mlp_kernel,
        out_shape=jax.ShapeDtypeStruct((B, 128), jnp.float32),
        in_specs=[vmem, vmem],
        out_specs=vmem,
    )(x_pad, packed_params)
    action = out[:, 0:3]     # softmax over batch of actor logits
    critic = out[:, 3:4]     # critic value
    return action, critic


def init_params(key):
    """nn.Linear-style init U(-1/sqrt(fan_in), 1/sqrt(fan_in)); weights stored (in, out)."""
    def linear(k, fan_in, fan_out):
        kw, kb = jax.random.split(k)
        bound = 1.0 / jnp.sqrt(jnp.float32(fan_in))
        w = jax.random.uniform(kw, (fan_in, fan_out), jnp.float32, -bound, bound)
        b = jax.random.uniform(kb, (1, fan_out), jnp.float32, -bound, bound)
        return w, b

    k0, k1, k2, k3 = jax.random.split(key, 4)
    w0, b0 = linear(k0, 25, 64)
    w1, b1 = linear(k1, 64, 64)
    wa, ba = linear(k2, 64, 3)
    wc, bc = linear(k3, 64, 1)
    return {"w0": w0, "b0": b0, "w1": w1, "b1": b1,
            "wa": wa, "ba": ba, "wc": wc, "bc": bc}


def pack_params(p):
    """Build the single (312, 128) f32 parameter slab (done once)."""
    slab = jnp.zeros((_TOTAL_ROWS, 128), jnp.float32)
    slab = slab.at[_ROW_W0:_ROW_W0 + 25, 0:64].set(p["w0"])
    slab = slab.at[_ROW_B0, 0:64].set(p["b0"].reshape(64))
    slab = slab.at[_ROW_W1:_ROW_W1 + 64, 0:64].set(p["w1"])
    slab = slab.at[_ROW_B1, 0:64].set(p["b1"].reshape(64))
    slab = slab.at[_ROW_WH:_ROW_WH + 64, 0:3].set(p["wa"])
    slab = slab.at[_ROW_WH:_ROW_WH + 64, 3:4].set(p["wc"])
    slab = slab.at[_ROW_BH, 0:3].set(p["ba"].reshape(3))
    slab = slab.at[_ROW_BH, 3:4].set(p["bc"].reshape(1))
    return slab


def reference_forward(x, p):
    h0 = jnp.maximum(x @ p["w0"] + p["b0"], 0.0)
    h1 = jnp.maximum(h0 @ p["w1"] + p["b1"], 0.0)
    logits = h1 @ p["wa"] + p["ba"]
    action = jax.nn.softmax(logits, axis=0)
    critic = h1 @ p["wc"] + p["bc"]
    return action, critic


if __name__ == "__main__":
    key = jax.random.PRNGKey(0)
    kx, kp = jax.random.split(key)

    B = 8
    x = jax.random.normal(kx, (B, 25), jnp.float32)
    params = init_params(kp)
    packed = pack_params(params)          # built once, reused every call

    action, critic = model_forward(x, packed)
    jax.block_until_ready((action, critic))

    ref_action, ref_critic = reference_forward(x, params)
    assert action.shape == (B, 3) and critic.shape == (B, 1)
    assert jnp.allclose(action, ref_action, atol=1e-5, rtol=1e-5)
    assert jnp.allclose(critic, ref_critic, atol=1e-5, rtol=1e-5)
    assert jnp.allclose(jnp.sum(action, axis=0), jnp.ones((3,)), atol=1e-5)

    print("KERNEL_OK")
</pallas_src>

<mosaic_0001>
module attributes {stable_mosaic.version = 11 : i64} {
  func.func @_mlp_kernel(%arg0: memref<8x32xf32, #tpu.memory_space<vmem>>, %arg1: memref<312x128xf32, #tpu.memory_space<vmem>>, %arg2: memref<8x128xf32, #tpu.memory_space<vmem>>) attributes {dimension_semantics = [], scalar_prefetch = 0 : i64, scratch_operands = 0 : i64, tpu.core_type = #tpu.core_type<tc>} {
    %c0 = arith.constant 0 : index
    %c0_0 = arith.constant 0 : index
    %0 = vector.load %arg0[%c0, %c0_0] : memref<8x32xf32, #tpu.memory_space<vmem>>, vector<8x32xf32>
    %c0_1 = arith.constant 0 : index
    %c0_2 = arith.constant 0 : index
    %1 = vector.load %arg1[%c0_1, %c0_2] : memref<312x128xf32, #tpu.memory_space<vmem>>, vector<32x128xf32>
    %c32 = arith.constant 32 : index
    %c0_3 = arith.constant 0 : index
    %2 = vector.load %arg1[%c32, %c0_3] : memref<312x128xf32, #tpu.memory_space<vmem>>, vector<1x128xf32>
    %c40 = arith.constant 40 : index
    %c0_4 = arith.constant 0 : index
    %3 = vector.load %arg1[%c40, %c0_4] : memref<312x128xf32, #tpu.memory_space<vmem>>, vector<128x128xf32>
    %c168 = arith.constant 168 : index
    %c0_5 = arith.constant 0 : index
    %4 = vector.load %arg1[%c168, %c0_5] : memref<312x128xf32, #tpu.memory_space<vmem>>, vector<1x128xf32>
    %c176 = arith.constant 176 : index
    %c0_6 = arith.constant 0 : index
    %5 = vector.load %arg1[%c176, %c0_6] : memref<312x128xf32, #tpu.memory_space<vmem>>, vector<128x128xf32>
    %c304 = arith.constant 304 : index
    %c0_7 = arith.constant 0 : index
    %6 = vector.load %arg1[%c304, %c0_7] : memref<312x128xf32, #tpu.memory_space<vmem>>, vector<1x128xf32>
    %cst = arith.constant dense<0.000000e+00> : vector<8x128xf32>
    %7 = tpu.matmul %0, %1, %cst {dimension_numbers = #tpu.dot_dimension_numbers<[1], [0], [0], [1], [0, 0, 1, 1], [], []>} : vector<8x32xf32>, vector<32x128xf32>, vector<8x128xf32> -> vector<8x128xf32>
    %8 = vector.broadcast %2 : vector<1x128xf32> to vector<8x128xf32>
    %9 = arith.addf %7, %8 : vector<8x128xf32>
    %cst_8 = arith.constant 0.000000e+00 : f32
    %10 = vector.broadcast %cst_8 : f32 to vector<8x128xf32>
    %11 = arith.maximumf %9, %10 : vector<8x128xf32>
    %cst_9 = arith.constant dense<0.000000e+00> : vector<8x128xf32>
    %12 = tpu.matmul %11, %3, %cst_9 {dimension_numbers = #tpu.dot_dimension_numbers<[1], [0], [0], [1], [0, 0, 1, 1], [], []>} : vector<8x128xf32>, vector<128x128xf32>, vector<8x128xf32> -> vector<8x128xf32>
    %13 = vector.broadcast %4 : vector<1x128xf32> to vector<8x128xf32>
    %14 = arith.addf %12, %13 : vector<8x128xf32>
    %cst_10 = arith.constant 0.000000e+00 : f32
    %15 = vector.broadcast %cst_10 : f32 to vector<8x128xf32>
    %16 = arith.maximumf %14, %15 : vector<8x128xf32>
    %cst_11 = arith.constant dense<0.000000e+00> : vector<8x128xf32>
    %17 = tpu.matmul %16, %5, %cst_11 {dimension_numbers = #tpu.dot_dimension_numbers<[1], [0], [0], [1], [0, 0, 1, 1], [], []>} : vector<8x128xf32>, vector<128x128xf32>, vector<8x128xf32> -> vector<8x128xf32>
    %18 = vector.broadcast %6 : vector<1x128xf32> to vector<8x128xf32>
    %19 = arith.addf %17, %18 : vector<8x128xf32>
    %cst_12 = arith.constant dense<0xFF800000> : vector<128xf32>
    %20 = vector.multi_reduction <maximumf>, %19, %cst_12 [0] : vector<8x128xf32> to vector<128xf32>
    %21 = vector.shape_cast %20 : vector<128xf32> to vector<1x128xf32>
    %22 = vector.broadcast %21 : vector<1x128xf32> to vector<8x128xf32>
    %23 = arith.subf %19, %22 : vector<8x128xf32>
    %24 = math.exp %23 : vector<8x128xf32>
    %cst_13 = arith.constant dense<0.000000e+00> : vector<128xf32>
    %25 = vector.multi_reduction <add>, %24, %cst_13 [0] : vector<8x128xf32> to vector<128xf32>
    %26 = vector.shape_cast %25 : vector<128xf32> to vector<1x128xf32>
    %27 = vector.broadcast %26 : vector<1x128xf32> to vector<8x128xf32>
    %28 = arith.divf %24, %27 : vector<8x128xf32>
    %29 = tpu.iota {dimensions = array<i32: 1>} : vector<8x128xi32>
    %c3_i32 = arith.constant 3 : i32
    %30 = vector.broadcast %c3_i32 : i32 to vector<8x128xi32>
    %31 = arith.cmpi eq, %29, %30 : vector<8x128xi32>
    %32 = arith.select %31, %19, %28 : vector<8x128xi1>, vector<8x128xf32>
    %c0_14 = arith.constant 0 : index
    %c0_15 = arith.constant 0 : index
    %33 = vector.load %arg2[%c0_14, %c0_15] : memref<8x128xf32, #tpu.memory_space<vmem>>, vector<8x128xf32>
    tpu.vector_store %arg2[%c0_14, %c0_15], %32 {strides = array<i32>} : memref<8x128xf32, #tpu.memory_space<vmem>>, vector<8x128xf32>,
    return
  }
}

</mosaic_0001>

<llo_original>
// kernel: tpu_custom_call.1
$region0: #{tpu_custom_call.1}
  #allocation0 [shape = 'u32[]', space=smem, size = 0x4, offset = 0x4, fixed_abs, tag = 'smem constant byte address 0x4 - core index']
  #allocation1 [shape = 'u32[144,128]{1,0:T(1,128)}', space=vmem, size = 0x12000, scoped, tag = 'internal scratch']
  %s0 = inlined_call_operand.hbm [shape: f32[8,32], index: 0, kind: input, shape index: {}]
  %s1 = inlined_call_operand.hbm [shape: f32[312,128], index: 1, kind: input, shape index: {}]
  %s2 = inlined_call_operand.hbm [shape: f32[8,128], index: 2, kind: output, shape index: {}]
  %s3 = sld [smem:[#allocation0]]
  $region26: #{tpu_custom_call.1} parent=0
    _
  %s5 = ssub.s32 1, %s3
  %s6 = scalar_select 0, %s5, %s3
  $region1: #{tpu_custom_call.1} parent=0
    #allocation2 [shape = 'u8[4096]{0}', space=vmem, size = 0x1000, scoped, tag = 'input window, operand 0, single buffered']
    #allocation3 [shape = 's32[1]{0}', space=sflag, size = 0x4, scoped, tag = 'scoped memory for tpu_custom_call.1']
    #allocation4 [shape = 's32[1]{0}', space=sflag, size = 0x4, scoped, tag = 'scoped memory for tpu_custom_call.1']
    #allocation5 [shape = 'u8[159744]{0}', space=vmem, size = 0x27000, scoped, tag = 'input window, operand 1, single buffered']
    #allocation6 [shape = 's32[1]{0}', space=sflag, size = 0x4, scoped, tag = 'scoped memory for tpu_custom_call.1']
    #allocation7 [shape = 'u8[4096]{0}', space=vmem, size = 0x1000, scoped, tag = 'output window, operand 0, single buffered']
    %7 = vsyncpa [#allocation3], 0
    %8 = vsyncpa [#allocation6], 0
    %9 = vsyncpa [#allocation4], 0
    // Predicated region
    $region2: #{tpu_custom_call.1} parent=1 // pred_check
      _
    $region3: #{tpu_custom_call.1} parent=1 // pred_check_branch
      %11 = sbr.rel (0) target = $region5
    $region4: #{tpu_custom_call.1} parent=1 // pred_region
      %s13 = ssub.s32 128, 128
      %14 = vsyncadd [#allocation3], %s13
      %s16 = sshll.u32 [#allocation2], 4
      %s17 = int_to_ptr.vmem [resolvable:$true] %s16
      %19 = dma.hbm_to_vmem [thread:$0]  %s0, 128, %s17, [#allocation3]
    $region5: #{tpu_custom_call.1} parent=1 // pred_fallthru
      _
    // Predicated region
    $region6: #{tpu_custom_call.1} parent=1 // pred_check
      _
    $region7: #{tpu_custom_call.1} parent=1 // pred_check_branch
      %21 = sbr.rel (0) target = $region9
    $region8: #{tpu_custom_call.1} parent=1 // pred_region
      %s23 = ssub.s32 4992, 4992
      %24 = vsyncadd [#allocation6], %s23
      %s25 = sshll.u32 [#allocation5], 4
      %s26 = int_to_ptr.vmem [resolvable:$true] %s25
      %31 = dma.hbm_to_vmem [thread:$0]  %s1, 4992, %s26, [#allocation6], 128, 128, 8
    $region9: #{tpu_custom_call.1} parent=1 // pred_fallthru
      _
    // Predicated region
    $region10: #{tpu_custom_call.1} parent=1 // pred_check
      _
    $region11: #{tpu_custom_call.1} parent=1 // pred_check_branch
      %33 = sbr.rel (0) target = $region13
    $region12: #{tpu_custom_call.1} parent=1 // pred_region
      %34 = dma.done [#allocation3], 128
    $region13: #{tpu_custom_call.1} parent=1 // pred_fallthru
      _
    // Predicated region
    $region14: #{tpu_custom_call.1} parent=1 // pred_check
      _
    $region15: #{tpu_custom_call.1} parent=1 // pred_check_branch
      %36 = sbr.rel (0) target = $region17
    $region16: #{tpu_custom_call.1} parent=1 // pred_region
      %37 = dma.done [#allocation6], 4992
    $region17: #{tpu_custom_call.1} parent=1 // pred_fallthru
      _
    %v38 = vld [vmem:[#allocation2] sm:$0xff]
    %v39 = vld [vmem:[#allocation5] sm:$0xff]
    %v40 = vld [vmem:[#allocation5 + $0x8] sm:$0xff]
    %v41 = vld [vmem:[#allocation5 + $0x10] sm:$0xff]
    %v42 = vld [vmem:[#allocation5 + $0x18] sm:$0xff]
    %v43 = vld [vmem:[#allocation5 + $0x20] sm:$0x1]
    %v44 = vld [vmem:[#allocation5 + $0x28] sm:$0xff]
    %v45 = vld [vmem:[#allocation5 + $0x30] sm:$0xff]
    %v46 = vld [vmem:[#allocation5 + $0x38] sm:$0xff]
    %v47 = vld [vmem:[#allocation5 + $0x40] sm:$0xff]
    %v48 = vld [vmem:[#allocation5 + $0x48] sm:$0xff]
    %v49 = vld [vmem:[#allocation5 + $0x50] sm:$0xff]
    %v50 = vld [vmem:[#allocation5 + $0x58] sm:$0xff]
    %v51 = vld [vmem:[#allocation5 + $0x60] sm:$0xff]
    %v52 = vld [vmem:[#allocation5 + $0x68] sm:$0xff]
    %v53 = vld [vmem:[#allocation5 + $0x70] sm:$0xff]
    %v54 = vld [vmem:[#allocation5 + $0x78] sm:$0xff]
    %v55 = vld [vmem:[#allocation5 + $0x80] sm:$0xff]
    %v56 = vld [vmem:[#allocation5 + $0x88] sm:$0xff]
    %v57 = vld [vmem:[#allocation5 + $0x90] sm:$0xff]
    %v58 = vld [vmem:[#allocation5 + $0x98] sm:$0xff]
    %v59 = vld [vmem:[#allocation5 + $0xa0] sm:$0xff]
    %v60 = vld [vmem:[#allocation5 + $0xa8] sm:$0x1]
    %v61 = vld [vmem:[#allocation5 + $0xb0] sm:$0xff]
    %v62 = vld [vmem:[#allocation5 + $0xb8] sm:$0xff]
    %v63 = vld [vmem:[#allocation5 + $0xc0] sm:$0xff]
    %v64 = vld [vmem:[#allocation5 + $0xc8] sm:$0xff]
    %v65 = vld [vmem:[#allocation5 + $0xd0] sm:$0xff]
    %v66 = vld [vmem:[#allocation5 + $0xd8] sm:$0xff]
    %v67 = vld [vmem:[#allocation5 + $0xe0] sm:$0xff]
    %v68 = vld [vmem:[#allocation5 + $0xe8] sm:$0xff]
    %v69 = vld [vmem:[#allocation5 + $0xf0] sm:$0xff]
    %v70 = vld [vmem:[#allocation5 + $0xf8] sm:$0xff]
    %v71 = vld [vmem:[#allocation5 + $0x100] sm:$0xff]
    %v72 = vld [vmem:[#allocation5 + $0x108] sm:$0xff]
    %v73 = vld [vmem:[#allocation5 + $0x110] sm:$0xff]
    %v74 = vld [vmem:[#allocation5 + $0x118] sm:$0xff]
    %v75 = vld [vmem:[#allocation5 + $0x120] sm:$0xff]
    %v76 = vld [vmem:[#allocation5 + $0x128] sm:$0xff]
    %v77 = vld [vmem:[#allocation5 + $0x130] sm:$0x1]
    %v78 = vlaneseq
    %v79 = vshrl.u32 %v78, 7
    %v80 = vsub.s32 0, %v79
    %v81 = vrot.slane %v43, %v80
    %vm82 = vcmask 261120
    %v84 = vsel %vm82, %v38, 0
    %86 = vmatprep.subr.mxu0 0.0
    %87 = vmatpush1.msra.mxu0 %v39
    %88 = vmatprep.subr.mxu0 0.0
    %89 = vmatpush1.msra.mxu0 %v40
    %90 = vmatprep.subr.mxu0 0.0
    %91 = vmatpush1.msra.mxu0 %v41
    %92 = vmatprep.subr.mxu0 0.0
    %93 = vmatpush1.msra.mxu0 %v42
    %94 = vmatprep.subr.mxu0 0.0
    %95 = vmatpush1.msra.mxu0 0.0
    %96 = vmatprep.subr.mxu0 0.0
    %97 = vmatpush1.msra.mxu0 0.0
    %98 = vmatprep.subr.mxu0 0.0
    %99 = vmatpush1.msra.mxu0 0.0
    %100 = vmatprep.subr.mxu0 0.0
    %101 = vmatpush1.msra.mxu0 0.0
    %102 = vmatprep.subr.mxu0 0.0
    %103 = vmatpush1.msra.mxu0 0.0
    %104 = vmatprep.subr.mxu0 0.0
    %105 = vmatpush1.msra.mxu0 0.0
    %106 = vmatprep.subr.mxu0 0.0
    %107 = vmatpush1.msra.mxu0 0.0
    %108 = vmatprep.subr.mxu0 0.0
    %109 = vmatpush1.msra.mxu0 0.0
    %110 = vmatprep.subr.mxu0 0.0
    %111 = vmatpush1.msra.mxu0 0.0
    %112 = vmatprep.subr.mxu0 0.0
    %113 = vmatpush1.msra.mxu0 0.0
    %114 = vmatprep.subr.mxu0 0.0
    %115 = vmatpush1.msra.mxu0 0.0
    %116 = vmatprep.subr.mxu0 0.0
    %117 = vmatpush1.msra.mxu0 0.0
    %118 = vmatprep.subr.mxu0 0.0
    %119 = vmatpush1.msra.mxu0 0.0
    %120 = vmatprep.subr.mxu0 0.0
    %121 = vmatpush1.msra.mxu0 0.0
    %122 = vmatprep.subr.mxu0 0.0
    %123 = vmatpush1.msra.mxu0 0.0
    %124 = vmatprep.subr.mxu0 0.0
    %125 = vmatpush1.msra.mxu0 0.0
    %126 = vmatprep.subr.mxu0 0.0
    %127 = vmatpush1.msra.mxu0 0.0
    %128 = vmatprep.subr.mxu0 0.0
    %129 = vmatpush1.msra.mxu0 0.0
    %130 = vmatprep.subr.mxu0 0.0
    %131 = vmatpush1.msra.mxu0 0.0
    %132 = vmatprep.subr.mxu0 0.0
    %133 = vmatpush1.msra.mxu0 0.0
    %134 = vmatprep.subr.mxu0 0.0
    %135 = vmatpush1.msra.mxu0 0.0
    %136 = vmatprep.subr.mxu0 0.0
    %137 = vmatpush1.msra.mxu0 0.0
    %138 = vmatprep.subr.mxu0 0.0
    %139 = vmatpush1.msra.mxu0 0.0
    %140 = vmatprep.subr.mxu0 0.0
    %141 = vmatpush1.msra.mxu0 0.0
    %142 = vmatprep.subr.mxu0 0.0
    %143 = vmatpush1.msra.mxu0 0.0
    %144 = vmatprep.subr.mxu0 0.0
    %145 = vmatpush1.msra.mxu0 0.0
    %146 = vmatprep.subr.mxu0 0.0
    %147 = vmatpush1.msra.mxu0 0.0
    %148 = vmatprep.subr.mxu0 0.0
    %149 = vmatpush1.msra.mxu0 0.0
    %150 = vmatprep.mubr.f32.mxu0 0.0
    %151 = vmatmul.mubr.f32.gmra.mrb[0].mxu0 %v84
    %v152 = vpop.f32.mrb[0].mxu0
    %v153 = vadd.f32 %v81, %v152
    %v154 = vpop.f32.mrb[0].mxu0
    %155 = vdwg.mxu0
    %v156 = vmax.f32 %v153, 0.0
    %v157 = vlaneseq
    %v158 = vshrl.u32 %v157, 7
    %v159 = vsub.s32 0, %v158
    %v160 = vrot.slane %v60, %v159
    %161 = vmatprep.subr.mxu0 0.0
    %162 = vmatpush1.msra.mxu0 %v44
    %163 = vmatprep.subr.mxu0 0.0
    %164 = vmatpush1.msra.mxu0 %v45
    %165 = vmatprep.subr.mxu0 0.0
    %166 = vmatpush1.msra.mxu0 %v46
    %167 = vmatprep.subr.mxu0 0.0
    %168 = vmatpush1.msra.mxu0 %v47
    %169 = vmatprep.subr.mxu0 0.0
    %170 = vmatpush1.msra.mxu0 %v48
    %171 = vmatprep.subr.mxu0 0.0
    %172 = vmatpush1.msra.mxu0 %v49
    %173 = vmatprep.subr.mxu0 0.0
    %174 = vmatpush1.msra.mxu0 %v50
    %175 = vmatprep.subr.mxu0 0.0
    %176 = vmatpush1.msra.mxu0 %v51
    %177 = vmatprep.subr.mxu0 0.0
    %178 = vmatpush1.msra.mxu0 %v52
    %179 = vmatprep.subr.mxu0 0.0
    %180 = vmatpush1.msra.mxu0 %v53
    %181 = vmatprep.subr.mxu0 0.0
    %182 = vmatpush1.msra.mxu0 %v54
    %183 = vmatprep.subr.mxu0 0.0
    %184 = vmatpush1.msra.mxu0 %v55
    %185 = vmatprep.subr.mxu0 0.0
    %186 = vmatpush1.msra.mxu0 %v56
    %187 = vmatprep.subr.mxu0 0.0
    %188 = vmatpush1.msra.mxu0 %v57
    %189 = vmatprep.subr.mxu0 0.0
    %190 = vmatpush1.msra.mxu0 %v58
    %191 = vmatprep.subr.mxu0 0.0
    %192 = vmatpush1.msra.mxu0 %v59
    %193 = vmatprep.subr.mxu0 0.0
    %194 = vmatpush1.msra.mxu0 0.0
    %195 = vmatprep.subr.mxu0 0.0
    %196 = vmatpush1.msra.mxu0 0.0
    %197 = vmatprep.subr.mxu0 0.0
    %198 = vmatpush1.msra.mxu0 0.0
    %199 = vmatprep.subr.mxu0 0.0
    %200 = vmatpush1.msra.mxu0 0.0
    %201 = vmatprep.subr.mxu0 0.0
    %202 = vmatpush1.msra.mxu0 0.0
    %203 = vmatprep.subr.mxu0 0.0
    %204 = vmatpush1.msra.mxu0 0.0
    %205 = vmatprep.subr.mxu0 0.0
    %206 = vmatpush1.msra.mxu0 0.0
    %207 = vmatprep.subr.mxu0 0.0
    %208 = vmatpush1.msra.mxu0 0.0
    %209 = vmatprep.subr.mxu0 0.0
    %210 = vmatpush1.msra.mxu0 0.0
    %211 = vmatprep.subr.mxu0 0.0
    %212 = vmatpush1.msra.mxu0 0.0
    %213 = vmatprep.subr.mxu0 0.0
    %214 = vmatpush1.msra.mxu0 0.0
    %215 = vmatprep.subr.mxu0 0.0
    %216 = vmatpush1.msra.mxu0 0.0
    %217 = vmatprep.subr.mxu0 0.0
    %218 = vmatpush1.msra.mxu0 0.0
    %219 = vmatprep.subr.mxu0 0.0
    %220 = vmatpush1.msra.mxu0 0.0
    %221 = vmatprep.subr.mxu0 0.0
    %222 = vmatpush1.msra.mxu0 0.0
    %223 = vmatprep.subr.mxu0 0.0
    %224 = vmatpush1.msra.mxu0 0.0
    %225 = vmatprep.mubr.f32.mxu0 0.0
    %226 = vmatmul.mubr.f32.gmra.mrb[0].mxu0 %v156
    %v227 = vpop.f32.mrb[0].mxu0
    %v228 = vadd.f32 %v160, %v227
    %v229 = vpop.f32.mrb[0].mxu0
    %230 = vdwg.mxu0
    %v231 = vmax.f32 %v228, 0.0
    %v232 = vlaneseq
    %v233 = vshrl.u32 %v232, 7
    %v234 = vsub.s32 0, %v233
    %v235 = vrot.slane %v77, %v234
    %236 = vmatprep.subr.mxu0 0.0
    %237 = vmatpush1.msra.mxu0 %v61
    %238 = vmatprep.subr.mxu0 0.0
    %239 = vmatpush1.msra.mxu0 %v62
    %240 = vmatprep.subr.mxu0 0.0
    %241 = vmatpush1.msra.mxu0 %v63
    %242 = vmatprep.subr.mxu0 0.0
    %243 = vmatpush1.msra.mxu0 %v64
    %244 = vmatprep.subr.mxu0 0.0
    %245 = vmatpush1.msra.mxu0 %v65
    %246 = vmatprep.subr.mxu0 0.0
    %247 = vmatpush1.msra.mxu0 %v66
    %248 = vmatprep.subr.mxu0 0.0
    %249 = vmatpush1.msra.mxu0 %v67
    %250 = vmatprep.subr.mxu0 0.0
    %251 = vmatpush1.msra.mxu0 %v68
    %252 = vmatprep.subr.mxu0 0.0
    %253 = vmatpush1.msra.mxu0 %v69
    %254 = vmatprep.subr.mxu0 0.0
    %255 = vmatpush1.msra.mxu0 %v70
    %256 = vmatprep.subr.mxu0 0.0
    %257 = vmatpush1.msra.mxu0 %v71
    %258 = vmatprep.subr.mxu0 0.0
    %259 = vmatpush1.msra.mxu0 %v72
    %260 = vmatprep.subr.mxu0 0.0
    %261 = vmatpush1.msra.mxu0 %v73
    %262 = vmatprep.subr.mxu0 0.0
    %263 = vmatpush1.msra.mxu0 %v74
    %264 = vmatprep.subr.mxu0 0.0
    %265 = vmatpush1.msra.mxu0 %v75
    %266 = vmatprep.subr.mxu0 0.0
    %267 = vmatpush1.msra.mxu0 %v76
    %268 = vmatprep.subr.mxu0 0.0
    %269 = vmatpush1.msra.mxu0 0.0
    %270 = vmatprep.subr.mxu0 0.0
    %271 = vmatpush1.msra.mxu0 0.0
    %272 = vmatprep.subr.mxu0 0.0
    %273 = vmatpush1.msra.mxu0 0.0
    %274 = vmatprep.subr.mxu0 0.0
    %275 = vmatpush1.msra.mxu0 0.0
    %276 = vmatprep.subr.mxu0 0.0
    %277 = vmatpush1.msra.mxu0 0.0
    %278 = vmatprep.subr.mxu0 0.0
    %279 = vmatpush1.msra.mxu0 0.0
    %280 = vmatprep.subr.mxu0 0.0
    %281 = vmatpush1.msra.mxu0 0.0
    %282 = vmatprep.subr.mxu0 0.0
    %283 = vmatpush1.msra.mxu0 0.0
    %284 = vmatprep.subr.mxu0 0.0
    %285 = vmatpush1.msra.mxu0 0.0
    %286 = vmatprep.subr.mxu0 0.0
    %287 = vmatpush1.msra.mxu0 0.0
    %288 = vmatprep.subr.mxu0 0.0
    %289 = vmatpush1.msra.mxu0 0.0
    %290 = vmatprep.subr.mxu0 0.0
    %291 = vmatpush1.msra.mxu0 0.0
    %292 = vmatprep.subr.mxu0 0.0
    %293 = vmatpush1.msra.mxu0 0.0
    %294 = vmatprep.subr.mxu0 0.0
    %295 = vmatpush1.msra.mxu0 0.0
    %296 = vmatprep.subr.mxu0 0.0
    %297 = vmatpush1.msra.mxu0 0.0
    %298 = vmatprep.subr.mxu0 0.0
    %299 = vmatpush1.msra.mxu0 0.0
    %300 = vmatprep.mubr.f32.mxu0 0.0
    %301 = vmatmul.mubr.f32.gmra.mrb[0].mxu0 %v231
    %v302 = vpop.f32.mrb[0].mxu0
    %v303 = vadd.f32 %v235, %v302
    %v304 = vpop.f32.mrb[0].mxu0
    %305 = vdwg.mxu0
    %v306 = vrot.slane %v303, 4
    %v307 = vmax.f32 %v303, %v306
    %v308 = vrot.slane %v307, 2
    %v309 = vmax.f32 %v307, %v308
    %v310 = vrot.slane %v309, 1
    %v311 = vmax.f32 %v309, %v310
    %v312 = vsub.f32 %v303, %v311
    %v313 = vmul.f32 %v312, 1.442695
    %v314 = vpow.pop %v313
    %v315 = vrot.slane %v314, 4
    %v316 = vadd.f32 %v314, %v315
    %v317 = vrot.slane %v316, 2
    %v318 = vadd.f32 %v316, %v317
    %v319 = vrot.slane %v318, 1
    %v320 = vadd.f32 %v318, %v319
    %v321 = vrcp.pop %v320
    %v322 = vmul.f32 %v314, %v321
    %v323 = vlaneseq
    %v324 = vand.u32 %v323, 127
    %vm325 = vcmp.eq.s32.totalorder %v324, 3
    %v326 = vsel %vm325, %v303, %v322
    %327 = vst [vmem:[#allocation7] sm:$0xff] %v326
    // Predicated region
    $region18: #{tpu_custom_call.1} parent=1 // pred_check
      _
    $region19: #{tpu_custom_call.1} parent=1 // pred_check_branch
      %329 = sbr.rel (0) target = $region21
    $region20: #{tpu_custom_call.1} parent=1 // pred_region
      %s331 = ssub.s32 128, 128
      %332 = vsyncadd [#allocation4], %s331
      %s334 = sshll.u32 [#allocation7], 4
      %s335 = int_to_ptr.vmem [resolvable:$true] %s334
      %337 = dma.vmem_to_hbm [thread:$0]  %s335, 128, %s2, [#allocation4]
    $region21: #{tpu_custom_call.1} parent=1 // pred_fallthru
      _
    // Predicated region
    $region22: #{tpu_custom_call.1} parent=1 // pred_check
      _
    $region23: #{tpu_custom_call.1} parent=1 // pred_check_branch
      %339 = sbr.rel (0) target = $region25
    $region24: #{tpu_custom_call.1} parent=1 // pred_region
      %340 = dma.done [#allocation4], 128
    $region25: #{tpu_custom_call.1} parent=1 // pred_fallthru
      _
    %341 = vsyncpa [#allocation3], 1
    %342 = vsyncpa [#allocation6], 1
    %343 = vsyncpa [#allocation4], 1

</llo_original>
